<compile_context>
chip_gen: v7x
topology: tpu7x:2x2x1
jax: 0.10.0
libtpu: 0.0.40
codegen_flags: <defaults>
</compile_context>

<pallas_src>
import functools

import numpy as np
import jax
import jax.numpy as jnp
from jax.experimental import pallas as pl
from jax.experimental.pallas import tpu as pltpu

HIDDEN = 32     # module default is 256; hidden_dim is a ctor arg, keep it small
IN_DIM = 512    # hard-coded by nn.Linear(512, hidden_dim) in the module
OUT_W = 128     # lane-dense packed-output width

# Packed output column layout (per row):
#   [0:H)        encoded_state
#   [H:2H)       experience_repr
#   2H+0 .. 2H+6 sa, own, rep, unity, valence, arousal, clarity
#   rest         zero padding


def _dot(a, w_ref, b_ref):
    return jnp.dot(a, w_ref[...], preferred_element_type=jnp.float32) + b_ref[...]


def asn_kernel(*refs, use_self_model, batch, hidden):
    H = hidden
    if use_self_model:
        (x_ref, sm_ref, wo1b_ref,
         w_e1, b_e1, w_e2, b_e2,
         w_f1, b_f1, w_f2, b_f2,
         w_s3, b_s3, w_x3, b_x3,
         w_o2, b_o2, w_r2, b_r2,
         out_ref) = refs
    else:
        (x_ref,
         w_e1, b_e1, w_e2, b_e2,
         w_f1, b_f1, w_f2, b_f2,
         w_s3, b_s3, w_x3, b_x3,
         w_o2, b_o2, w_r2, b_r2,
         out_ref) = refs

    x = x_ref[...].astype(jnp.float32)
    rows = x.shape[0]

    # state_encoder: Linear(512,H) -> ReLU -> Dropout(0.1) -> Linear(H,H)
    # TODO(synk): nn.Dropout is implemented as eval-mode identity (no RNG drop).
    enc = _dot(jnp.maximum(_dot(x, w_e1, b_e1), 0.0), w_e2, b_e2)

    # Fused first-stage heads: [s1 (H/2) | x1 (H) | o1_enc (H) | r1 (128)] + pad
    c1 = H // 2           # end of s1 block
    c2 = c1 + H           # end of x1 block
    c3 = c2 + H           # end of o1 block
    c4 = c3 + 128         # end of r1 block
    fused = _dot(enc, w_f1, b_f1)

    # ownership first layer: enc @ w_o1[:H] (+ sm @ w_o1[H:]) + b_o1
    own_h = fused[:, c2:c3]
    if use_self_model:
        own_h = own_h + jnp.dot(sm_ref[...].astype(jnp.float32), wo1b_ref[...],
                                preferred_element_type=jnp.float32)

    # Fused second stage (block-diagonal): [relu(s1)|relu(x1)] @ diag(w_s2, w_x2)
    he = jnp.maximum(fused[:, 0:c2], 0.0)                 # (rows, H/2 + H)
    se = jnp.maximum(_dot(he, w_f2, b_f2), 0.0)           # (rows, 64 + 2H)

    # self_awareness tail: Linear(64,1) -> Sigmoid
    sa = jax.nn.sigmoid(_dot(se[:, 0:64], w_s3, b_s3))    # (rows, 1)
    # experience tail: Linear(2H, H)
    exp = _dot(se[:, 64:64 + 2 * H], w_x3, b_x3)          # (rows, H)
    # ownership tail: ReLU -> Linear(H,1) -> Sigmoid
    own = jax.nn.sigmoid(_dot(jnp.maximum(own_h, 0.0), w_o2, b_o2))
    # reportability tail: ReLU -> Linear(128,1) -> Sigmoid
    rep = jax.nn.sigmoid(_dot(jnp.maximum(fused[:, c3:c4], 0.0), w_r2, b_r2))

    # unity = sigmoid(mean over ALL elements of enc) — real batch rows only
    # (padded sublane rows are excluded).
    unity_val = jax.nn.sigmoid(jnp.sum(enc[:batch, :]) / float(batch * H))
    unity = jnp.broadcast_to(unity_val, (rows, 1))

    # post-processing transcendentals moved into the kernel (host reads row 0)
    valence = jnp.tanh(exp[:, 0:1])
    arousal = jax.nn.sigmoid(exp[:, 1:2])
    clarity = jax.nn.sigmoid(exp[:, 2:3])

    pad_w = OUT_W - (2 * H + 7)
    out_ref[...] = jnp.concatenate(
        [enc, exp, sa, own, rep, unity, valence, arousal, clarity,
         jnp.zeros((rows, pad_w), jnp.float32)],
        axis=-1,
    )


def init_params(key, hidden=HIDDEN, in_dim=IN_DIM):
    """Deterministic synthetic weights (torch-style uniform(-1/sqrt(fan_in), ..))."""
    layer_dims = [
        ("e1", in_dim, hidden), ("e2", hidden, hidden),
        ("s1", hidden, hidden // 2), ("s2", hidden // 2, 64), ("s3", 64, 1),
        ("x1", hidden, hidden), ("x2", hidden, 2 * hidden), ("x3", 2 * hidden, hidden),
        ("o1", 2 * hidden, hidden), ("o2", hidden, 1),
        ("r1", hidden, 128), ("r2", 128, 1),
    ]
    params = {}
    for name, fan_in, fan_out in layer_dims:
        key, kw, kb = jax.random.split(key, 3)
        bound = 1.0 / float(fan_in) ** 0.5
        params["w_" + name] = jax.random.uniform(
            kw, (fan_in, fan_out), jnp.float32, -bound, bound)
        params["b_" + name] = jax.random.uniform(
            kb, (1, fan_out), jnp.float32, -bound, bound)
    return params


def _fuse_params(params, hidden, use_self_model):
    """Trace-time weight fusion: concat enc-consuming heads; block-diag stage 2."""
    H = hidden
    w_o1 = params["w_o1"]
    # ownership fold when self_model is absent: cat([enc, enc]) @ w_o1
    #   == enc @ (w_o1[:H] + w_o1[H:])
    w_o1_enc = w_o1[:H] if use_self_model else (w_o1[:H] + w_o1[H:])

    w_f1 = jnp.concatenate(
        [params["w_s1"], params["w_x1"], w_o1_enc, params["w_r1"]], axis=1)
    b_f1 = jnp.concatenate(
        [params["b_s1"], params["b_x1"], params["b_o1"], params["b_r1"]], axis=1)
    pad = (-w_f1.shape[1]) % 128
    if pad:
        w_f1 = jnp.pad(w_f1, ((0, 0), (0, pad)))
        b_f1 = jnp.pad(b_f1, ((0, 0), (0, pad)))

    # block-diagonal [w_s2 ; w_x2]: (H/2 + H, 64 + 2H)
    w_f2 = jnp.zeros((H // 2 + H, 64 + 2 * H), jnp.float32)
    w_f2 = w_f2.at[:H // 2, :64].set(params["w_s2"])
    w_f2 = w_f2.at[H // 2:, 64:].set(params["w_x2"])
    b_f2 = jnp.concatenate([params["b_s2"], params["b_x2"]], axis=1)
    return w_f1, b_f1, w_f2, b_f2


def attention_schema_forward(attention_state, params, self_model=None, hidden=HIDDEN):
    """Runs the fused Pallas kernel; returns the packed (rows_padded, 128) output."""
    H = hidden
    b = attention_state.shape[0]
    rows = ((b + 7) // 8) * 8          # pad batch to full sublanes
    use_self_model = self_model is not None

    x = attention_state.astype(jnp.float32)
    if rows != b:
        x = jnp.pad(x, ((0, rows - b), (0, 0)))

    w_f1, b_f1, w_f2, b_f2 = _fuse_params(params, H, use_self_model)

    inputs = [x]
    if use_self_model:
        sm = self_model.astype(jnp.float32)
        if rows != b:
            sm = jnp.pad(sm, ((0, rows - b), (0, 0)))
        inputs += [sm, params["w_o1"][H:]]
    inputs += [
        params["w_e1"], params["b_e1"], params["w_e2"], params["b_e2"],
        w_f1, b_f1, w_f2, b_f2,
        params["w_s3"], params["b_s3"], params["w_x3"], params["b_x3"],
        params["w_o2"], params["b_o2"], params["w_r2"], params["b_r2"],
    ]

    kernel = functools.partial(
        asn_kernel, use_self_model=use_self_model, batch=b, hidden=H)
    vmem = pl.BlockSpec(memory_space=pltpu.MemorySpace.VMEM)

    f1_w = w_f1.shape[1]
    flops = 2 * rows * (IN_DIM * H + H * H + H * f1_w
                        + (H // 2 + H) * (64 + 2 * H)
                        + 64 + 64 * H + H + 128)
    param_bytes = sum(int(a.size) * 4 for a in inputs[1:])
    cost = pl.CostEstimate(
        flops=int(flops),
        transcendentals=int(7 * rows + 1),
        bytes_accessed=int(rows * IN_DIM * 4 + rows * OUT_W * 4 + param_bytes),
    )

    packed = pl.pallas_call(
        kernel,
        out_shape=jax.ShapeDtypeStruct((rows, OUT_W), jnp.float32),
        in_specs=[vmem] * len(inputs),
        out_specs=vmem,
        cost_estimate=cost,
    )(*inputs)
    return packed


def build_schema(packed, batch, hidden=HIDDEN):
    """Single device->host transfer, then pure host-side slicing/dict assembly."""
    H = hidden
    p = np.asarray(jax.device_get(packed))
    enc = p[:batch, 0:H]
    exp = p[:batch, H:2 * H]
    base = 2 * H
    # TODO(synk): AttentionSchema dataclass / .item() glue is plain Python here.
    return {
        "self_awareness": float(p[0, base + 0]),
        "attention_attribution": "I am focusing on this",
        "subjective_experience": {
            "representation": exp,
            "valence": float(p[0, base + 4]),
            "arousal": float(p[0, base + 5]),
            "clarity": float(p[0, base + 6]),
        },
        "attention_ownership": float(p[0, base + 1]),
        "intentionality": 0.8,
        "unity": float(p[0, base + 3]),
        "reportability": float(p[0, base + 2]),
        "_encoded_state": enc,
    }


if __name__ == "__main__":
    key = jax.random.PRNGKey(0)
    kp, kx, ks = jax.random.split(key, 3)
    params = init_params(kp)
    # batch=1 (the torch forward's .item() calls imply a single-row input)
    attention_state = jax.random.normal(kx, (1, IN_DIM), jnp.float32)

    # path 1: self_model is None (ownership weight folded at trace time)
    packed = attention_schema_forward(attention_state, params, self_model=None)
    jax.block_until_ready(packed)
    schema = build_schema(packed, batch=1)

    # path 2: explicit self_model (extra split-weight matmul inside the kernel)
    self_model = jax.random.normal(ks, (1, HIDDEN), jnp.float32)
    packed_sm = attention_schema_forward(attention_state, params, self_model=self_model)
    jax.block_until_ready(packed_sm)
    schema_sm = build_schema(packed_sm, batch=1)

    print("KERNEL_OK")
</pallas_src>

<mosaic_0001>
module attributes {stable_mosaic.version = 11 : i64} {
  func.func @asn_kernel(%arg0: memref<8x512xf32, #tpu.memory_space<vmem>>, %arg1: memref<512x32xf32, #tpu.memory_space<vmem>>, %arg2: memref<1x32xf32, #tpu.memory_space<vmem>>, %arg3: memref<32x32xf32, #tpu.memory_space<vmem>>, %arg4: memref<1x32xf32, #tpu.memory_space<vmem>>, %arg5: memref<32x256xf32, #tpu.memory_space<vmem>>, %arg6: memref<1x256xf32, #tpu.memory_space<vmem>>, %arg7: memref<48x128xf32, #tpu.memory_space<vmem>>, %arg8: memref<1x128xf32, #tpu.memory_space<vmem>>, %arg9: memref<64x1xf32, #tpu.memory_space<vmem>>, %arg10: memref<1x1xf32, #tpu.memory_space<vmem>>, %arg11: memref<64x32xf32, #tpu.memory_space<vmem>>, %arg12: memref<1x32xf32, #tpu.memory_space<vmem>>, %arg13: memref<32x1xf32, #tpu.memory_space<vmem>>, %arg14: memref<1x1xf32, #tpu.memory_space<vmem>>, %arg15: memref<128x1xf32, #tpu.memory_space<vmem>>, %arg16: memref<1x1xf32, #tpu.memory_space<vmem>>, %arg17: memref<8x128xf32, #tpu.memory_space<vmem>>) attributes {dimension_semantics = [], scalar_prefetch = 0 : i64, scratch_operands = 0 : i64, tpu.core_type = #tpu.core_type<tc>} {
    %c0 = arith.constant 0 : index
    %c0_0 = arith.constant 0 : index
    %0 = vector.load %arg0[%c0, %c0_0] : memref<8x512xf32, #tpu.memory_space<vmem>>, vector<8x512xf32>
    %c0_1 = arith.constant 0 : index
    %c0_2 = arith.constant 0 : index
    %1 = vector.load %arg1[%c0_1, %c0_2] : memref<512x32xf32, #tpu.memory_space<vmem>>, vector<512x32xf32>
    %cst = arith.constant dense<0.000000e+00> : vector<8x32xf32>
    %2 = tpu.matmul %0, %1, %cst {dimension_numbers = #tpu.dot_dimension_numbers<[1], [0], [0], [1], [0, 0, 1, 1], [], []>} : vector<8x512xf32>, vector<512x32xf32>, vector<8x32xf32> -> vector<8x32xf32>
    %c0_3 = arith.constant 0 : index
    %c0_4 = arith.constant 0 : index
    %3 = vector.load %arg2[%c0_3, %c0_4] : memref<1x32xf32, #tpu.memory_space<vmem>>, vector<1x32xf32>
    %4 = vector.broadcast %3 : vector<1x32xf32> to vector<8x32xf32>
    %5 = arith.addf %2, %4 : vector<8x32xf32>
    %cst_5 = arith.constant 0.000000e+00 : f32
    %6 = vector.broadcast %cst_5 : f32 to vector<8x32xf32>
    %7 = arith.maximumf %5, %6 : vector<8x32xf32>
    %c0_6 = arith.constant 0 : index
    %c0_7 = arith.constant 0 : index
    %8 = vector.load %arg3[%c0_6, %c0_7] : memref<32x32xf32, #tpu.memory_space<vmem>>, vector<32x32xf32>
    %cst_8 = arith.constant dense<0.000000e+00> : vector<8x32xf32>
    %9 = tpu.matmul %7, %8, %cst_8 {dimension_numbers = #tpu.dot_dimension_numbers<[1], [0], [0], [1], [0, 0, 1, 1], [], []>} : vector<8x32xf32>, vector<32x32xf32>, vector<8x32xf32> -> vector<8x32xf32>
    %c0_9 = arith.constant 0 : index
    %c0_10 = arith.constant 0 : index
    %10 = vector.load %arg4[%c0_9, %c0_10] : memref<1x32xf32, #tpu.memory_space<vmem>>, vector<1x32xf32>
    %11 = vector.broadcast %10 : vector<1x32xf32> to vector<8x32xf32>
    %12 = arith.addf %9, %11 : vector<8x32xf32>
    %c0_11 = arith.constant 0 : index
    %c0_12 = arith.constant 0 : index
    %13 = vector.load %arg5[%c0_11, %c0_12] : memref<32x256xf32, #tpu.memory_space<vmem>>, vector<32x256xf32>
    %cst_13 = arith.constant dense<0.000000e+00> : vector<8x256xf32>
    %14 = tpu.matmul %12, %13, %cst_13 {dimension_numbers = #tpu.dot_dimension_numbers<[1], [0], [0], [1], [0, 0, 1, 1], [], []>} : vector<8x32xf32>, vector<32x256xf32>, vector<8x256xf32> -> vector<8x256xf32>
    %c0_14 = arith.constant 0 : index
    %c0_15 = arith.constant 0 : index
    %15 = vector.load %arg6[%c0_14, %c0_15] : memref<1x256xf32, #tpu.memory_space<vmem>>, vector<1x256xf32>
    %16 = vector.broadcast %15 : vector<1x256xf32> to vector<8x256xf32>
    %17 = arith.addf %14, %16 : vector<8x256xf32>
    %18 = vector.extract_strided_slice %17 {offsets = [0, 48], sizes = [8, 32], strides = [1, 1]} : vector<8x256xf32> to vector<8x32xf32>
    %19 = vector.extract_strided_slice %17 {offsets = [0, 0], sizes = [8, 48], strides = [1, 1]} : vector<8x256xf32> to vector<8x48xf32>
    %cst_16 = arith.constant 0.000000e+00 : f32
    %20 = vector.broadcast %cst_16 : f32 to vector<8x48xf32>
    %21 = arith.maximumf %19, %20 : vector<8x48xf32>
    %c0_17 = arith.constant 0 : index
    %c0_18 = arith.constant 0 : index
    %22 = vector.load %arg7[%c0_17, %c0_18] : memref<48x128xf32, #tpu.memory_space<vmem>>, vector<48x128xf32>
    %cst_19 = arith.constant dense<0.000000e+00> : vector<8x128xf32>
    %23 = tpu.matmul %21, %22, %cst_19 {dimension_numbers = #tpu.dot_dimension_numbers<[1], [0], [0], [1], [0, 0, 1, 1], [], []>} : vector<8x48xf32>, vector<48x128xf32>, vector<8x128xf32> -> vector<8x128xf32>
    %c0_20 = arith.constant 0 : index
    %c0_21 = arith.constant 0 : index
    %24 = vector.load %arg8[%c0_20, %c0_21] : memref<1x128xf32, #tpu.memory_space<vmem>>, vector<1x128xf32>
    %25 = vector.broadcast %24 : vector<1x128xf32> to vector<8x128xf32>
    %26 = arith.addf %23, %25 : vector<8x128xf32>
    %cst_22 = arith.constant 0.000000e+00 : f32
    %27 = vector.broadcast %cst_22 : f32 to vector<8x128xf32>
    %28 = arith.maximumf %26, %27 : vector<8x128xf32>
    %29 = vector.extract_strided_slice %28 {offsets = [0, 0], sizes = [8, 64], strides = [1, 1]} : vector<8x128xf32> to vector<8x64xf32>
    %c0_23 = arith.constant 0 : index
    %c0_24 = arith.constant 0 : index
    %30 = vector.load %arg9[%c0_23, %c0_24] : memref<64x1xf32, #tpu.memory_space<vmem>>, vector<64x1xf32>
    %cst_25 = arith.constant dense<0.000000e+00> : vector<8x1xf32>
    %31 = tpu.matmul %29, %30, %cst_25 {dimension_numbers = #tpu.dot_dimension_numbers<[1], [0], [0], [1], [0, 0, 1, 1], [], []>} : vector<8x64xf32>, vector<64x1xf32>, vector<8x1xf32> -> vector<8x1xf32>
    %c0_26 = arith.constant 0 : index
    %c0_27 = arith.constant 0 : index
    %32 = vector.load %arg10[%c0_26, %c0_27] : memref<1x1xf32, #tpu.memory_space<vmem>>, vector<1x1xf32>
    %33 = vector.broadcast %32 : vector<1x1xf32> to vector<8x1xf32>
    %34 = arith.addf %31, %33 : vector<8x1xf32>
    %35 = arith.negf %34 : vector<8x1xf32>
    %36 = math.exp %35 : vector<8x1xf32>
    %cst_28 = arith.constant 1.000000e+00 : f32
    %37 = vector.broadcast %cst_28 : f32 to vector<8x1xf32>
    %38 = arith.addf %37, %36 : vector<8x1xf32>
    %39 = arith.divf %37, %38 : vector<8x1xf32>
    %40 = vector.extract_strided_slice %28 {offsets = [0, 64], sizes = [8, 64], strides = [1, 1]} : vector<8x128xf32> to vector<8x64xf32>
    %c0_29 = arith.constant 0 : index
    %c0_30 = arith.constant 0 : index
    %41 = vector.load %arg11[%c0_29, %c0_30] : memref<64x32xf32, #tpu.memory_space<vmem>>, vector<64x32xf32>
    %cst_31 = arith.constant dense<0.000000e+00> : vector<8x32xf32>
    %42 = tpu.matmul %40, %41, %cst_31 {dimension_numbers = #tpu.dot_dimension_numbers<[1], [0], [0], [1], [0, 0, 1, 1], [], []>} : vector<8x64xf32>, vector<64x32xf32>, vector<8x32xf32> -> vector<8x32xf32>
    %c0_32 = arith.constant 0 : index
    %c0_33 = arith.constant 0 : index
    %43 = vector.load %arg12[%c0_32, %c0_33] : memref<1x32xf32, #tpu.memory_space<vmem>>, vector<1x32xf32>
    %44 = vector.broadcast %43 : vector<1x32xf32> to vector<8x32xf32>
    %45 = arith.addf %42, %44 : vector<8x32xf32>
    %cst_34 = arith.constant 0.000000e+00 : f32
    %46 = vector.broadcast %cst_34 : f32 to vector<8x32xf32>
    %47 = arith.maximumf %18, %46 : vector<8x32xf32>
    %c0_35 = arith.constant 0 : index
    %c0_36 = arith.constant 0 : index
    %48 = vector.load %arg13[%c0_35, %c0_36] : memref<32x1xf32, #tpu.memory_space<vmem>>, vector<32x1xf32>
    %cst_37 = arith.constant dense<0.000000e+00> : vector<8x1xf32>
    %49 = tpu.matmul %47, %48, %cst_37 {dimension_numbers = #tpu.dot_dimension_numbers<[1], [0], [0], [1], [0, 0, 1, 1], [], []>} : vector<8x32xf32>, vector<32x1xf32>, vector<8x1xf32> -> vector<8x1xf32>
    %c0_38 = arith.constant 0 : index
    %c0_39 = arith.constant 0 : index
    %50 = vector.load %arg14[%c0_38, %c0_39] : memref<1x1xf32, #tpu.memory_space<vmem>>, vector<1x1xf32>
    %51 = vector.broadcast %50 : vector<1x1xf32> to vector<8x1xf32>
    %52 = arith.addf %49, %51 : vector<8x1xf32>
    %53 = arith.negf %52 : vector<8x1xf32>
    %54 = math.exp %53 : vector<8x1xf32>
    %cst_40 = arith.constant 1.000000e+00 : f32
    %55 = vector.broadcast %cst_40 : f32 to vector<8x1xf32>
    %56 = arith.addf %55, %54 : vector<8x1xf32>
    %57 = arith.divf %55, %56 : vector<8x1xf32>
    %58 = vector.extract_strided_slice %17 {offsets = [0, 80], sizes = [8, 128], strides = [1, 1]} : vector<8x256xf32> to vector<8x128xf32>
    %cst_41 = arith.constant 0.000000e+00 : f32
    %59 = vector.broadcast %cst_41 : f32 to vector<8x128xf32>
    %60 = arith.maximumf %58, %59 : vector<8x128xf32>
    %c0_42 = arith.constant 0 : index
    %c0_43 = arith.constant 0 : index
    %61 = vector.load %arg15[%c0_42, %c0_43] : memref<128x1xf32, #tpu.memory_space<vmem>>, vector<128x1xf32>
    %cst_44 = arith.constant dense<0.000000e+00> : vector<8x1xf32>
    %62 = tpu.matmul %60, %61, %cst_44 {dimension_numbers = #tpu.dot_dimension_numbers<[1], [0], [0], [1], [0, 0, 1, 1], [], []>} : vector<8x128xf32>, vector<128x1xf32>, vector<8x1xf32> -> vector<8x1xf32>
    %c0_45 = arith.constant 0 : index
    %c0_46 = arith.constant 0 : index
    %63 = vector.load %arg16[%c0_45, %c0_46] : memref<1x1xf32, #tpu.memory_space<vmem>>, vector<1x1xf32>
    %64 = vector.broadcast %63 : vector<1x1xf32> to vector<8x1xf32>
    %65 = arith.addf %62, %64 : vector<8x1xf32>
    %66 = arith.negf %65 : vector<8x1xf32>
    %67 = math.exp %66 : vector<8x1xf32>
    %cst_47 = arith.constant 1.000000e+00 : f32
    %68 = vector.broadcast %cst_47 : f32 to vector<8x1xf32>
    %69 = arith.addf %68, %67 : vector<8x1xf32>
    %70 = arith.divf %68, %69 : vector<8x1xf32>
    %71 = vector.extract_strided_slice %12 {offsets = [0, 0], sizes = [1, 32], strides = [1, 1]} : vector<8x32xf32> to vector<1x32xf32>
    %72 = vector.shape_cast %71 : vector<1x32xf32> to vector<1x1x32xf32>
    %cst_48 = arith.constant dense<0.000000e+00> : vector<1xf32>
    %73 = vector.multi_reduction <add>, %72, %cst_48 [1, 2] : vector<1x1x32xf32> to vector<1xf32>
    %74 = vector.shape_cast %73 : vector<1xf32> to vector<1x1x1xf32>
    %75 = vector.extract %74[0, 0, 0] : f32 from vector<1x1x1xf32>
    %cst_49 = arith.constant 3.200000e+01 : f32
    %76 = arith.divf %75, %cst_49 : f32
    %77 = arith.negf %76 : f32
    %78 = math.exp %77 : f32
    %cst_50 = arith.constant 1.000000e+00 : f32
    %79 = arith.addf %cst_50, %78 : f32
    %80 = arith.divf %cst_50, %79 : f32
    %81 = vector.broadcast %80 : f32 to vector<8x1xf32>
    %82 = vector.extract_strided_slice %45 {offsets = [0, 0], sizes = [8, 1], strides = [1, 1]} : vector<8x32xf32> to vector<8x1xf32>
    %83 = math.tanh %82 : vector<8x1xf32>
    %84 = vector.extract_strided_slice %45 {offsets = [0, 1], sizes = [8, 1], strides = [1, 1]} : vector<8x32xf32> to vector<8x1xf32>
    %85 = arith.negf %84 : vector<8x1xf32>
    %86 = math.exp %85 : vector<8x1xf32>
    %cst_51 = arith.constant 1.000000e+00 : f32
    %87 = vector.broadcast %cst_51 : f32 to vector<8x1xf32>
    %88 = arith.addf %87, %86 : vector<8x1xf32>
    %89 = arith.divf %87, %88 : vector<8x1xf32>
    %90 = vector.extract_strided_slice %45 {offsets = [0, 2], sizes = [8, 1], strides = [1, 1]} : vector<8x32xf32> to vector<8x1xf32>
    %91 = arith.negf %90 : vector<8x1xf32>
    %92 = math.exp %91 : vector<8x1xf32>
    %cst_52 = arith.constant 1.000000e+00 : f32
    %93 = vector.broadcast %cst_52 : f32 to vector<8x1xf32>
    %94 = arith.addf %93, %92 : vector<8x1xf32>
    %95 = arith.divf %93, %94 : vector<8x1xf32>
    %cst_53 = arith.constant 0.000000e+00 : f32
    %96 = vector.broadcast %cst_53 : f32 to vector<8x57xf32>
    %97 = tpu.concatenate %12, %45, %39, %57, %70, %81, %83, %89, %95, %96 in 1 : vector<8x32xf32>, vector<8x32xf32>, vector<8x1xf32>, vector<8x1xf32>, vector<8x1xf32>, vector<8x1xf32>, vector<8x1xf32>, vector<8x1xf32>, vector<8x1xf32>, vector<8x57xf32> -> vector<8x128xf32>
    %c0_54 = arith.constant 0 : index
    %c0_55 = arith.constant 0 : index
    %98 = vector.load %arg17[%c0_54, %c0_55] : memref<8x128xf32, #tpu.memory_space<vmem>>, vector<8x128xf32>
    tpu.vector_store %arg17[%c0_54, %c0_55], %97 {strides = array<i32>} : memref<8x128xf32, #tpu.memory_space<vmem>>, vector<8x128xf32>,
    return
  }
}

</mosaic_0001>

<llo_original>
// kernel: tpu_custom_call.1
$region0: #{tpu_custom_call.1}
  #allocation0 [shape = 'u32[]', space=smem, size = 0x4, offset = 0x4, fixed_abs, tag = 'smem constant byte address 0x4 - core index']
  #allocation1 [shape = 'u32[144,128]{1,0:T(1,128)}', space=vmem, size = 0x12000, scoped, tag = 'internal scratch']
  #allocation2 [shape = 'f32[1,1]{1,0:T(1,128)S(1)}', space=vmem, size = 0x200, scoped, tag = 'scoped memory for tpu_custom_call.1']
  #allocation3 [shape = 'f32[1,1]{1,0:T(1,128)S(1)}', space=vmem, size = 0x200, scoped, tag = 'scoped memory for tpu_custom_call.1']
  #allocation4 [shape = 'f32[1,1]{1,0:T(1,128)S(1)}', space=vmem, size = 0x200, scoped, tag = 'scoped memory for tpu_custom_call.1']
  %s0 = inlined_call_operand.vmem [shape: f32[8,512], index: 0, kind: input, shape index: {}]
  %s1 = inlined_call_operand.vmem [shape: f32[512,32], index: 1, kind: input, shape index: {}]
  %s2 = inlined_call_operand.vmem [shape: f32[1,32], index: 2, kind: input, shape index: {}]
  %s3 = inlined_call_operand.vmem [shape: f32[32,32], index: 3, kind: input, shape index: {}]
  %s4 = inlined_call_operand.vmem [shape: f32[1,32], index: 4, kind: input, shape index: {}]
  %s5 = inlined_call_operand.vmem [shape: f32[32,256], index: 5, kind: input, shape index: {}]
  %s6 = inlined_call_operand.vmem [shape: f32[1,256], index: 6, kind: input, shape index: {}]
  %s7 = inlined_call_operand.vmem [shape: f32[48,128], index: 7, kind: input, shape index: {}]
  %s8 = inlined_call_operand.vmem [shape: f32[1,128], index: 8, kind: input, shape index: {}]
  %s9 = inlined_call_operand.vmem [shape: f32[64,1], index: 9, kind: input, shape index: {}]
  %s10 = inlined_call_operand.<no memory space> [shape: f32[1,1], index: 10, kind: input, shape index: {}]
  %s11 = inlined_call_operand.vmem [shape: f32[64,32], index: 11, kind: input, shape index: {}]
  %s12 = inlined_call_operand.vmem [shape: f32[1,32], index: 12, kind: input, shape index: {}]
  %s13 = inlined_call_operand.vmem [shape: f32[32,1], index: 13, kind: input, shape index: {}]
  %s14 = inlined_call_operand.<no memory space> [shape: f32[1,1], index: 14, kind: input, shape index: {}]
  %s15 = inlined_call_operand.vmem [shape: f32[128,1], index: 15, kind: input, shape index: {}]
  %s16 = inlined_call_operand.<no memory space> [shape: f32[1,1], index: 16, kind: input, shape index: {}]
  %s17 = inlined_call_operand.hbm [shape: f32[8,128], index: 17, kind: output, shape index: {}]
  %s18 = sld [smem:[#allocation0]]
  $region78: #{tpu_custom_call.1} parent=0
    _
  %s20 = ssub.s32 1, %s18
  %s21 = scalar_select 0, %s20, %s18
  %v22 = vstv %s10
  %23 = vst [vmem:[#allocation2] sm:$0x1] %v22
  %v24 = vstv %s14
  %25 = vst [vmem:[#allocation3] sm:$0x1] %v24
  %v26 = vstv %s16
  %27 = vst [vmem:[#allocation4] sm:$0x1] %v26
  $region1: #{tpu_custom_call.1} parent=0
    #allocation5 [shape = 'u8[4096]{0}', space=vmem, size = 0x1000, scoped, tag = 'output window, operand 0, single buffered']
    #allocation6 [shape = 's32[1]{0}', space=sflag, size = 0x4, scoped, tag = 'scoped memory for tpu_custom_call.1']
    %28 = vsyncpa [#allocation6], 0
    // Predicated region
    $region2: #{tpu_custom_call.1} parent=1 // pred_check
      _
    $region3: #{tpu_custom_call.1} parent=1 // pred_check_branch
      %30 = sbr.rel (0) target = $region5
    $region4: #{tpu_custom_call.1} parent=1 // pred_region
      _
    $region5: #{tpu_custom_call.1} parent=1 // pred_fallthru
      _
    // Predicated region
    $region6: #{tpu_custom_call.1} parent=1 // pred_check
      _
    $region7: #{tpu_custom_call.1} parent=1 // pred_check_branch
      %32 = sbr.rel (0) target = $region9
    $region8: #{tpu_custom_call.1} parent=1 // pred_region
      _
    $region9: #{tpu_custom_call.1} parent=1 // pred_fallthru
      _
    // Predicated region
    $region10: #{tpu_custom_call.1} parent=1 // pred_check
      _
    $region11: #{tpu_custom_call.1} parent=1 // pred_check_branch
      %34 = sbr.rel (0) target = $region13
    $region12: #{tpu_custom_call.1} parent=1 // pred_region
      _
    $region13: #{tpu_custom_call.1} parent=1 // pred_fallthru
      _
    // Predicated region
    $region14: #{tpu_custom_call.1} parent=1 // pred_check
      _
    $region15: #{tpu_custom_call.1} parent=1 // pred_check_branch
      %36 = sbr.rel (0) target = $region17
    $region16: #{tpu_custom_call.1} parent=1 // pred_region
      _
    $region17: #{tpu_custom_call.1} parent=1 // pred_fallthru
      _
    // Predicated region
    $region18: #{tpu_custom_call.1} parent=1 // pred_check
      _
    $region19: #{tpu_custom_call.1} parent=1 // pred_check_branch
      %38 = sbr.rel (0) target = $region21
    $region20: #{tpu_custom_call.1} parent=1 // pred_region
      _
    $region21: #{tpu_custom_call.1} parent=1 // pred_fallthru
      _
    // Predicated region
    $region22: #{tpu_custom_call.1} parent=1 // pred_check
      _
    $region23: #{tpu_custom_call.1} parent=1 // pred_check_branch
      %40 = sbr.rel (0) target = $region25
    $region24: #{tpu_custom_call.1} parent=1 // pred_region
      _
    $region25: #{tpu_custom_call.1} parent=1 // pred_fallthru
      _
    // Predicated region
    $region26: #{tpu_custom_call.1} parent=1 // pred_check
      _
    $region27: #{tpu_custom_call.1} parent=1 // pred_check_branch
      %42 = sbr.rel (0) target = $region29
    $region28: #{tpu_custom_call.1} parent=1 // pred_region
      _
    $region29: #{tpu_custom_call.1} parent=1 // pred_fallthru
      _
    // Predicated region
    $region30: #{tpu_custom_call.1} parent=1 // pred_check
      _
    $region31: #{tpu_custom_call.1} parent=1 // pred_check_branch
      %44 = sbr.rel (0) target = $region33
    $region32: #{tpu_custom_call.1} parent=1 // pred_region
      _
    $region33: #{tpu_custom_call.1} parent=1 // pred_fallthru
      _
    // Predicated region
    $region34: #{tpu_custom_call.1} parent=1 // pred_check
      _
    $region35: #{tpu_custom_call.1} parent=1 // pred_check_branch
      %46 = sbr.rel (0) target = $region37
    $region36: #{tpu_custom_call.1} parent=1 // pred_region
      _
    $region37: #{tpu_custom_call.1} parent=1 // pred_fallthru
      _
    // Predicated region
    $region38: #{tpu_custom_call.1} parent=1 // pred_check
      _
    $region39: #{tpu_custom_call.1} parent=1 // pred_check_branch
      %48 = sbr.rel (0) target = $region41
    $region40: #{tpu_custom_call.1} parent=1 // pred_region
      _
    $region41: #{tpu_custom_call.1} parent=1 // pred_fallthru
      _
    // Predicated region
    $region42: #{tpu_custom_call.1} parent=1 // pred_check
      _
    $region43: #{tpu_custom_call.1} parent=1 // pred_check_branch
      %50 = sbr.rel (0) target = $region45
    $region44: #{tpu_custom_call.1} parent=1 // pred_region
      _
    $region45: #{tpu_custom_call.1} parent=1 // pred_fallthru
      _
    // Predicated region
    $region46: #{tpu_custom_call.1} parent=1 // pred_check
      _
    $region47: #{tpu_custom_call.1} parent=1 // pred_check_branch
      %52 = sbr.rel (0) target = $region49
    $region48: #{tpu_custom_call.1} parent=1 // pred_region
      _
    $region49: #{tpu_custom_call.1} parent=1 // pred_fallthru
      _
    // Predicated region
    $region50: #{tpu_custom_call.1} parent=1 // pred_check
      _
    $region51: #{tpu_custom_call.1} parent=1 // pred_check_branch
      %54 = sbr.rel (0) target = $region53
    $region52: #{tpu_custom_call.1} parent=1 // pred_region
      _
    $region53: #{tpu_custom_call.1} parent=1 // pred_fallthru
      _
    // Predicated region
    $region54: #{tpu_custom_call.1} parent=1 // pred_check
      _
    $region55: #{tpu_custom_call.1} parent=1 // pred_check_branch
      %56 = sbr.rel (0) target = $region57
    $region56: #{tpu_custom_call.1} parent=1 // pred_region
      _
    $region57: #{tpu_custom_call.1} parent=1 // pred_fallthru
      _
    // Predicated region
    $region58: #{tpu_custom_call.1} parent=1 // pred_check
      _
    $region59: #{tpu_custom_call.1} parent=1 // pred_check_branch
      %58 = sbr.rel (0) target = $region61
    $region60: #{tpu_custom_call.1} parent=1 // pred_region
      _
    $region61: #{tpu_custom_call.1} parent=1 // pred_fallthru
      _
    // Predicated region
    $region62: #{tpu_custom_call.1} parent=1 // pred_check
      _
    $region63: #{tpu_custom_call.1} parent=1 // pred_check_branch
      %60 = sbr.rel (0) target = $region65
    $region64: #{tpu_custom_call.1} parent=1 // pred_region
      _
    $region65: #{tpu_custom_call.1} parent=1 // pred_fallthru
      _
    // Predicated region
    $region66: #{tpu_custom_call.1} parent=1 // pred_check
      _
    $region67: #{tpu_custom_call.1} parent=1 // pred_check_branch
      %62 = sbr.rel (0) target = $region69
    $region68: #{tpu_custom_call.1} parent=1 // pred_region
      _
    $region69: #{tpu_custom_call.1} parent=1 // pred_fallthru
      _
    %v63 = vld [vmem:[%s0] sm:$0xff]
    %v64 = vld [vmem:[%s0 + $0x8] sm:$0xff]
    %v65 = vld [vmem:[%s0 + $0x10] sm:$0xff]
    %v66 = vld [vmem:[%s0 + $0x18] sm:$0xff]
    %v67 = vld [vmem:[%s1] sm:$0xff]
    %v68 = vld [vmem:[%s1 + $0x8] sm:$0xff]
    %v69 = vld [vmem:[%s1 + $0x10] sm:$0xff]
    %v70 = vld [vmem:[%s1 + $0x18] sm:$0xff]
    %v71 = vld [vmem:[%s1 + $0x20] sm:$0xff]
    %v72 = vld [vmem:[%s1 + $0x28] sm:$0xff]
    %v73 = vld [vmem:[%s1 + $0x30] sm:$0xff]
    %v74 = vld [vmem:[%s1 + $0x38] sm:$0xff]
    %v75 = vld [vmem:[%s1 + $0x40] sm:$0xff]
    %v76 = vld [vmem:[%s1 + $0x48] sm:$0xff]
    %v77 = vld [vmem:[%s1 + $0x50] sm:$0xff]
    %v78 = vld [vmem:[%s1 + $0x58] sm:$0xff]
    %v79 = vld [vmem:[%s1 + $0x60] sm:$0xff]
    %v80 = vld [vmem:[%s1 + $0x68] sm:$0xff]
    %v81 = vld [vmem:[%s1 + $0x70] sm:$0xff]
    %v82 = vld [vmem:[%s1 + $0x78] sm:$0xff]
    %v83 = vld [vmem:[%s1 + $0x80] sm:$0xff]
    %v84 = vld [vmem:[%s1 + $0x88] sm:$0xff]
    %v85 = vld [vmem:[%s1 + $0x90] sm:$0xff]
    %v86 = vld [vmem:[%s1 + $0x98] sm:$0xff]
    %v87 = vld [vmem:[%s1 + $0xa0] sm:$0xff]
    %v88 = vld [vmem:[%s1 + $0xa8] sm:$0xff]
    %v89 = vld [vmem:[%s1 + $0xb0] sm:$0xff]
    %v90 = vld [vmem:[%s1 + $0xb8] sm:$0xff]
    %v91 = vld [vmem:[%s1 + $0xc0] sm:$0xff]
    %v92 = vld [vmem:[%s1 + $0xc8] sm:$0xff]
    %v93 = vld [vmem:[%s1 + $0xd0] sm:$0xff]
    %v94 = vld [vmem:[%s1 + $0xd8] sm:$0xff]
    %v95 = vld [vmem:[%s1 + $0xe0] sm:$0xff]
    %v96 = vld [vmem:[%s1 + $0xe8] sm:$0xff]
    %v97 = vld [vmem:[%s1 + $0xf0] sm:$0xff]
    %v98 = vld [vmem:[%s1 + $0xf8] sm:$0xff]
    %v99 = vld [vmem:[%s1 + $0x100] sm:$0xff]
    %v100 = vld [vmem:[%s1 + $0x108] sm:$0xff]
    %v101 = vld [vmem:[%s1 + $0x110] sm:$0xff]
    %v102 = vld [vmem:[%s1 + $0x118] sm:$0xff]
    %v103 = vld [vmem:[%s1 + $0x120] sm:$0xff]
    %v104 = vld [vmem:[%s1 + $0x128] sm:$0xff]
    %v105 = vld [vmem:[%s1 + $0x130] sm:$0xff]
    %v106 = vld [vmem:[%s1 + $0x138] sm:$0xff]
    %v107 = vld [vmem:[%s1 + $0x140] sm:$0xff]
    %v108 = vld [vmem:[%s1 + $0x148] sm:$0xff]
    %v109 = vld [vmem:[%s1 + $0x150] sm:$0xff]
    %v110 = vld [vmem:[%s1 + $0x158] sm:$0xff]
    %v111 = vld [vmem:[%s1 + $0x160] sm:$0xff]
    %v112 = vld [vmem:[%s1 + $0x168] sm:$0xff]
    %v113 = vld [vmem:[%s1 + $0x170] sm:$0xff]
    %v114 = vld [vmem:[%s1 + $0x178] sm:$0xff]
    %v115 = vld [vmem:[%s1 + $0x180] sm:$0xff]
    %v116 = vld [vmem:[%s1 + $0x188] sm:$0xff]
    %v117 = vld [vmem:[%s1 + $0x190] sm:$0xff]
    %v118 = vld [vmem:[%s1 + $0x198] sm:$0xff]
    %v119 = vld [vmem:[%s1 + $0x1a0] sm:$0xff]
    %v120 = vld [vmem:[%s1 + $0x1a8] sm:$0xff]
    %v121 = vld [vmem:[%s1 + $0x1b0] sm:$0xff]
    %v122 = vld [vmem:[%s1 + $0x1b8] sm:$0xff]
    %v123 = vld [vmem:[%s1 + $0x1c0] sm:$0xff]
    %v124 = vld [vmem:[%s1 + $0x1c8] sm:$0xff]
    %v125 = vld [vmem:[%s1 + $0x1d0] sm:$0xff]
    %v126 = vld [vmem:[%s1 + $0x1d8] sm:$0xff]
    %v127 = vld [vmem:[%s1 + $0x1e0] sm:$0xff]
    %v128 = vld [vmem:[%s1 + $0x1e8] sm:$0xff]
    %v129 = vld [vmem:[%s1 + $0x1f0] sm:$0xff]
    %v130 = vld [vmem:[%s1 + $0x1f8] sm:$0xff]
    %v131 = vld [vmem:[%s2] sm:$0x1]
    %v133 = vlaneseq
    %v134 = vshrl.u32 %v133, 7
    %v135 = vsub.s32 0, %v134
    %v136 = vrot.slane %v131, %v135
    %138 = vmatprep.subr.mxu0 0.0
    %139 = vmatpush1.msra.mxu0 %v67
    %140 = vmatprep.subr.mxu0 0.0
    %141 = vmatpush1.msra.mxu0 %v68
    %142 = vmatprep.subr.mxu0 0.0
    %143 = vmatpush1.msra.mxu0 %v69
    %144 = vmatprep.subr.mxu0 0.0
    %145 = vmatpush1.msra.mxu0 %v70
    %146 = vmatprep.subr.mxu0 0.0
    %147 = vmatpush1.msra.mxu0 %v71
    %148 = vmatprep.subr.mxu0 0.0
    %149 = vmatpush1.msra.mxu0 %v72
    %150 = vmatprep.subr.mxu0 0.0
    %151 = vmatpush1.msra.mxu0 %v73
    %152 = vmatprep.subr.mxu0 0.0
    %153 = vmatpush1.msra.mxu0 %v74
    %154 = vmatprep.subr.mxu0 0.0
    %155 = vmatpush1.msra.mxu0 %v75
    %156 = vmatprep.subr.mxu0 0.0
    %157 = vmatpush1.msra.mxu0 %v76
    %158 = vmatprep.subr.mxu0 0.0
    %159 = vmatpush1.msra.mxu0 %v77
    %160 = vmatprep.subr.mxu0 0.0
    %161 = vmatpush1.msra.mxu0 %v78
    %162 = vmatprep.subr.mxu0 0.0
    %163 = vmatpush1.msra.mxu0 %v79
    %164 = vmatprep.subr.mxu0 0.0
    %165 = vmatpush1.msra.mxu0 %v80
    %166 = vmatprep.subr.mxu0 0.0
    %167 = vmatpush1.msra.mxu0 %v81
    %168 = vmatprep.subr.mxu0 0.0
    %169 = vmatpush1.msra.mxu0 %v82
    %170 = vmatprep.subr.mxu0 0.0
    %171 = vmatpush1.msra.mxu0 %v83
    %172 = vmatprep.subr.mxu0 0.0
    %173 = vmatpush1.msra.mxu0 %v84
    %174 = vmatprep.subr.mxu0 0.0
    %175 = vmatpush1.msra.mxu0 %v85
    %176 = vmatprep.subr.mxu0 0.0
    %177 = vmatpush1.msra.mxu0 %v86
    %178 = vmatprep.subr.mxu0 0.0
    %179 = vmatpush1.msra.mxu0 %v87
    %180 = vmatprep.subr.mxu0 0.0
    %181 = vmatpush1.msra.mxu0 %v88
    %182 = vmatprep.subr.mxu0 0.0
    %183 = vmatpush1.msra.mxu0 %v89
    %184 = vmatprep.subr.mxu0 0.0
    %185 = vmatpush1.msra.mxu0 %v90
    %186 = vmatprep.subr.mxu0 0.0
    %187 = vmatpush1.msra.mxu0 %v91
    %188 = vmatprep.subr.mxu0 0.0
    %189 = vmatpush1.msra.mxu0 %v92
    %190 = vmatprep.subr.mxu0 0.0
    %191 = vmatpush1.msra.mxu0 %v93
    %192 = vmatprep.subr.mxu0 0.0
    %193 = vmatpush1.msra.mxu0 %v94
    %194 = vmatprep.subr.mxu0 0.0
    %195 = vmatpush1.msra.mxu0 %v95
    %196 = vmatprep.subr.mxu0 0.0
    %197 = vmatpush1.msra.mxu0 %v96
    %198 = vmatprep.subr.mxu0 0.0
    %199 = vmatpush1.msra.mxu0 %v97
    %200 = vmatprep.subr.mxu0 0.0
    %201 = vmatpush1.msra.mxu0 %v98
    %202 = vmatprep.mubr.f32.mxu0 %v64
    %203 = vmatmul.mubr.f32.gmra.mrb[0].mxu0 %v63
    %v204 = vpop.f32.mrb[0].mxu0
    %v205 = vadd.f32 %v136, %v204
    %v206 = vpop.f32.mrb[0].mxu0
    %207 = vdwg.mxu0
    %208 = vmatprep.subr.mxu0 0.0
    %209 = vmatpush1.msra.mxu0 %v99
    %210 = vmatprep.subr.mxu0 0.0
    %211 = vmatpush1.msra.mxu0 %v100
    %212 = vmatprep.subr.mxu0 0.0
    %213 = vmatpush1.msra.mxu0 %v101
    %214 = vmatprep.subr.mxu0 0.0
    %215 = vmatpush1.msra.mxu0 %v102
    %216 = vmatprep.subr.mxu0 0.0
    %217 = vmatpush1.msra.mxu0 %v103
    %218 = vmatprep.subr.mxu0 0.0
    %219 = vmatpush1.msra.mxu0 %v104
    %220 = vmatprep.subr.mxu0 0.0
    %221 = vmatpush1.msra.mxu0 %v105
    %222 = vmatprep.subr.mxu0 0.0
    %223 = vmatpush1.msra.mxu0 %v106
    %224 = vmatprep.subr.mxu0 0.0
    %225 = vmatpush1.msra.mxu0 %v107
    %226 = vmatprep.subr.mxu0 0.0
    %227 = vmatpush1.msra.mxu0 %v108
    %228 = vmatprep.subr.mxu0 0.0
    %229 = vmatpush1.msra.mxu0 %v109
    %230 = vmatprep.subr.mxu0 0.0
    %231 = vmatpush1.msra.mxu0 %v110
    %232 = vmatprep.subr.mxu0 0.0
    %233 = vmatpush1.msra.mxu0 %v111
    %234 = vmatprep.subr.mxu0 0.0
    %235 = vmatpush1.msra.mxu0 %v112
    %236 = vmatprep.subr.mxu0 0.0
    %237 = vmatpush1.msra.mxu0 %v113
    %238 = vmatprep.subr.mxu0 0.0
    %239 = vmatpush1.msra.mxu0 %v114
    %240 = vmatprep.subr.mxu0 0.0
    %241 = vmatpush1.msra.mxu0 %v115
    %242 = vmatprep.subr.mxu0 0.0
    %243 = vmatpush1.msra.mxu0 %v116
    %244 = vmatprep.subr.mxu0 0.0
    %245 = vmatpush1.msra.mxu0 %v117
    %246 = vmatprep.subr.mxu0 0.0
    %247 = vmatpush1.msra.mxu0 %v118
    %248 = vmatprep.subr.mxu0 0.0
    %249 = vmatpush1.msra.mxu0 %v119
    %250 = vmatprep.subr.mxu0 0.0
    %251 = vmatpush1.msra.mxu0 %v120
    %252 = vmatprep.subr.mxu0 0.0
    %253 = vmatpush1.msra.mxu0 %v121
    %254 = vmatprep.subr.mxu0 0.0
    %255 = vmatpush1.msra.mxu0 %v122
    %256 = vmatprep.subr.mxu0 0.0
    %257 = vmatpush1.msra.mxu0 %v123
    %258 = vmatprep.subr.mxu0 0.0
    %259 = vmatpush1.msra.mxu0 %v124
    %260 = vmatprep.subr.mxu0 0.0
    %261 = vmatpush1.msra.mxu0 %v125
    %262 = vmatprep.subr.mxu0 0.0
    %263 = vmatpush1.msra.mxu0 %v126
    %264 = vmatprep.subr.mxu0 0.0
    %265 = vmatpush1.msra.mxu0 %v127
    %266 = vmatprep.subr.mxu0 0.0
    %267 = vmatpush1.msra.mxu0 %v128
    %268 = vmatprep.subr.mxu0 0.0
    %269 = vmatpush1.msra.mxu0 %v129
    %270 = vmatprep.subr.mxu0 0.0
    %271 = vmatpush1.msra.mxu0 %v130
    %272 = vmatprep.mubr.f32.mxu0 %v66
    %273 = vmatmul.mubr.f32.gmra.mrb[0].mxu0 %v65
    %v274 = vpop.f32.mrb[0].mxu0
    %v275 = vadd.f32 %v205, %v274
    %v276 = vpop.f32.mrb[0].mxu0
    %277 = vdwg.mxu0
    %v278 = vmax.f32 %v275, 0.0
    %v279 = vld [vmem:[%s3] sm:$0xff]
    %v280 = vld [vmem:[%s3 + $0x8] sm:$0xff]
    %v281 = vld [vmem:[%s3 + $0x10] sm:$0xff]
    %v282 = vld [vmem:[%s3 + $0x18] sm:$0xff]
    %v283 = vld [vmem:[%s4] sm:$0x1]
    %v285 = vlaneseq
    %v286 = vshrl.u32 %v285, 7
    %v287 = vsub.s32 0, %v286
    %v288 = vrot.slane %v283, %v287
    %vm290 = vcmask 261120
    %v292 = vsel %vm290, %v278, 0
    %294 = vmatprep.subr.mxu0 0.0
    %295 = vmatpush1.msra.mxu0 %v279
    %296 = vmatprep.subr.mxu0 0.0
    %297 = vmatpush1.msra.mxu0 %v280
    %298 = vmatprep.subr.mxu0 0.0
    %299 = vmatpush1.msra.mxu0 %v281
    %300 = vmatprep.subr.mxu0 0.0
    %301 = vmatpush1.msra.mxu0 %v282
    %302 = vmatprep.subr.mxu0 0.0
    %303 = vmatpush1.msra.mxu0 0.0
    %304 = vmatprep.subr.mxu0 0.0
    %305 = vmatpush1.msra.mxu0 0.0
    %306 = vmatprep.subr.mxu0 0.0
    %307 = vmatpush1.msra.mxu0 0.0
    %308 = vmatprep.subr.mxu0 0.0
    %309 = vmatpush1.msra.mxu0 0.0
    %310 = vmatprep.subr.mxu0 0.0
    %311 = vmatpush1.msra.mxu0 0.0
    %312 = vmatprep.subr.mxu0 0.0
    %313 = vmatpush1.msra.mxu0 0.0
    %314 = vmatprep.subr.mxu0 0.0
    %315 = vmatpush1.msra.mxu0 0.0
    %316 = vmatprep.subr.mxu0 0.0
    %317 = vmatpush1.msra.mxu0 0.0
    %318 = vmatprep.subr.mxu0 0.0
    %319 = vmatpush1.msra.mxu0 0.0
    %320 = vmatprep.subr.mxu0 0.0
    %321 = vmatpush1.msra.mxu0 0.0
    %322 = vmatprep.subr.mxu0 0.0
    %323 = vmatpush1.msra.mxu0 0.0
    %324 = vmatprep.subr.mxu0 0.0
    %325 = vmatpush1.msra.mxu0 0.0
    %326 = vmatprep.subr.mxu0 0.0
    %327 = vmatpush1.msra.mxu0 0.0
    %328 = vmatprep.subr.mxu0 0.0
    %329 = vmatpush1.msra.mxu0 0.0
    %330 = vmatprep.subr.mxu0 0.0
    %331 = vmatpush1.msra.mxu0 0.0
    %332 = vmatprep.subr.mxu0 0.0
    %333 = vmatpush1.msra.mxu0 0.0
    %334 = vmatprep.subr.mxu0 0.0
    %335 = vmatpush1.msra.mxu0 0.0
    %336 = vmatprep.subr.mxu0 0.0
    %337 = vmatpush1.msra.mxu0 0.0
    %338 = vmatprep.subr.mxu0 0.0
    %339 = vmatpush1.msra.mxu0 0.0
    %340 = vmatprep.subr.mxu0 0.0
    %341 = vmatpush1.msra.mxu0 0.0
    %342 = vmatprep.subr.mxu0 0.0
    %343 = vmatpush1.msra.mxu0 0.0
    %344 = vmatprep.subr.mxu0 0.0
    %345 = vmatpush1.msra.mxu0 0.0
    %346 = vmatprep.subr.mxu0 0.0
    %347 = vmatpush1.msra.mxu0 0.0
    %348 = vmatprep.subr.mxu0 0.0
    %349 = vmatpush1.msra.mxu0 0.0
    %350 = vmatprep.subr.mxu0 0.0
    %351 = vmatpush1.msra.mxu0 0.0
    %352 = vmatprep.subr.mxu0 0.0
    %353 = vmatpush1.msra.mxu0 0.0
    %354 = vmatprep.subr.mxu0 0.0
    %355 = vmatpush1.msra.mxu0 0.0
    %356 = vmatprep.subr.mxu0 0.0
    %357 = vmatpush1.msra.mxu0 0.0
    %358 = vmatprep.mubr.f32.mxu0 0.0
    %359 = vmatmul.mubr.f32.gmra.mrb[0].mxu0 %v292
    %v360 = vpop.f32.mrb[0].mxu0
    %v361 = vadd.f32 %v288, %v360
    %v362 = vpop.f32.mrb[0].mxu0
    %363 = vdwg.mxu0
    %v364 = vld [vmem:[%s5] sm:$0xff]
    %v365 = vld [vmem:[%s5 + $0x8] sm:$0xff]
    %v366 = vld [vmem:[%s5 + $0x10] sm:$0xff]
    %v367 = vld [vmem:[%s5 + $0x18] sm:$0xff]
    %v368 = vld [vmem:[%s5 + $0x20] sm:$0xff]
    %v369 = vld [vmem:[%s5 + $0x28] sm:$0xff]
    %v370 = vld [vmem:[%s5 + $0x30] sm:$0xff]
    %v371 = vld [vmem:[%s5 + $0x38] sm:$0xff]
    %v372 = vld [vmem:[%s6] sm:$0x3]
    %v374 = vlaneseq
    %v375 = vshrl.u32 %v374, 7
    %v376 = vsub.s32 0, %v375
    %v377 = vrot.slane %v372, %v376
    %v378 = vlaneseq
    %v379 = vshrl.u32 %v378, 7
    %v380 = vsub.s32 1, %v379
    %v381 = vrot.slane %v372, %v380
    %v385 = vsel %vm290, %v361, 0
    %387 = vmatprep.subr.mxu0 %v365
    %388 = vmatpush1.msra.mxu0 %v364
    %389 = vmatprep.subr.mxu0 %v367
    %390 = vmatpush1.msra.mxu0 %v366
    %391 = vmatprep.subr.mxu0 %v369
    %392 = vmatpush1.msra.mxu0 %v368
    %393 = vmatprep.subr.mxu0 %v371
    %394 = vmatpush1.msra.mxu0 %v370
    %395 = vmatprep.subr.mxu0 0.0
    %396 = vmatpush1.msra.mxu0 0.0
    %397 = vmatprep.subr.mxu0 0.0
    %398 = vmatpush1.msra.mxu0 0.0
    %399 = vmatprep.subr.mxu0 0.0
    %400 = vmatpush1.msra.mxu0 0.0
    %401 = vmatprep.subr.mxu0 0.0
    %402 = vmatpush1.msra.mxu0 0.0
    %403 = vmatprep.subr.mxu0 0.0
    %404 = vmatpush1.msra.mxu0 0.0
    %405 = vmatprep.subr.mxu0 0.0
    %406 = vmatpush1.msra.mxu0 0.0
    %407 = vmatprep.subr.mxu0 0.0
    %408 = vmatpush1.msra.mxu0 0.0
    %409 = vmatprep.subr.mxu0 0.0
    %410 = vmatpush1.msra.mxu0 0.0
    %411 = vmatprep.subr.mxu0 0.0
    %412 = vmatpush1.msra.mxu0 0.0
    %413 = vmatprep.subr.mxu0 0.0
    %414 = vmatpush1.msra.mxu0 0.0
    %415 = vmatprep.subr.mxu0 0.0
    %416 = vmatpush1.msra.mxu0 0.0
    %417 = vmatprep.subr.mxu0 0.0
    %418 = vmatpush1.msra.mxu0 0.0
    %419 = vmatprep.subr.mxu0 0.0
    %420 = vmatpush1.msra.mxu0 0.0
    %421 = vmatprep.subr.mxu0 0.0
    %422 = vmatpush1.msra.mxu0 0.0
    %423 = vmatprep.subr.mxu0 0.0
    %424 = vmatpush1.msra.mxu0 0.0
    %425 = vmatprep.subr.mxu0 0.0
    %426 = vmatpush1.msra.mxu0 0.0
    %427 = vmatprep.subr.mxu0 0.0
    %428 = vmatpush1.msra.mxu0 0.0
    %429 = vmatprep.subr.mxu0 0.0
    %430 = vmatpush1.msra.mxu0 0.0
    %431 = vmatprep.subr.mxu0 0.0
    %432 = vmatpush1.msra.mxu0 0.0
    %433 = vmatprep.subr.mxu0 0.0
    %434 = vmatpush1.msra.mxu0 0.0
    %435 = vmatprep.subr.mxu0 0.0
    %436 = vmatpush1.msra.mxu0 0.0
    %437 = vmatprep.subr.mxu0 0.0
    %438 = vmatpush1.msra.mxu0 0.0
    %439 = vmatprep.subr.mxu0 0.0
    %440 = vmatpush1.msra.mxu0 0.0
    %441 = vmatprep.subr.mxu0 0.0
    %442 = vmatpush1.msra.mxu0 0.0
    %443 = vmatprep.subr.mxu0 0.0
    %444 = vmatpush1.msra.mxu0 0.0
    %445 = vmatprep.subr.mxu0 0.0
    %446 = vmatpush1.msra.mxu0 0.0
    %447 = vmatprep.subr.mxu0 0.0
    %448 = vmatpush1.msra.mxu0 0.0
    %449 = vmatprep.subr.mxu0 0.0
    %450 = vmatpush1.msra.mxu0 0.0
    %451 = vmatprep.mubr.f32.mxu0 0.0
    %452 = vmatmul.mubr.f32.gmra.mrb[0].mxu0 %v385
    %v453 = vpop.f32.mrb[0].mxu0
    %v454 = vadd.f32 %v377, %v453
    %v455 = vpop.f32.mrb[0].mxu0
    %v456 = vadd.f32 %v381, %v455
    %457 = vdwg.mxu0
    %v458 = vmax.f32 %v454, 0.0
    %v459 = vld [vmem:[%s7] sm:$0xff]
    %v460 = vld [vmem:[%s7 + $0x8] sm:$0xff]
    %v461 = vld [vmem:[%s7 + $0x10] sm:$0xff]
    %v462 = vld [vmem:[%s7 + $0x18] sm:$0xff]
    %v463 = vld [vmem:[%s7 + $0x20] sm:$0xff]
    %v464 = vld [vmem:[%s7 + $0x28] sm:$0xff]
    %v465 = vld [vmem:[%s8] sm:$0x1]
    %v467 = vlaneseq
    %v468 = vshrl.u32 %v467, 7
    %v469 = vsub.s32 0, %v468
    %v470 = vrot.slane %v465, %v469
    %vm472 = vcmask 392192
    %v474 = vsel %vm472, %v458, 0
    %476 = vmatprep.subr.mxu0 0.0
    %477 = vmatpush1.msra.mxu0 %v459
    %478 = vmatprep.subr.mxu0 0.0
    %479 = vmatpush1.msra.mxu0 %v460
    %480 = vmatprep.subr.mxu0 0.0
    %481 = vmatpush1.msra.mxu0 %v461
    %482 = vmatprep.subr.mxu0 0.0
    %483 = vmatpush1.msra.mxu0 %v462
    %484 = vmatprep.subr.mxu0 0.0
    %485 = vmatpush1.msra.mxu0 %v463
    %486 = vmatprep.subr.mxu0 0.0
    %487 = vmatpush1.msra.mxu0 %v464
    %488 = vmatprep.subr.mxu0 0.0
    %489 = vmatpush1.msra.mxu0 0.0
    %490 = vmatprep.subr.mxu0 0.0
    %491 = vmatpush1.msra.mxu0 0.0
    %492 = vmatprep.subr.mxu0 0.0
    %493 = vmatpush1.msra.mxu0 0.0
    %494 = vmatprep.subr.mxu0 0.0
    %495 = vmatpush1.msra.mxu0 0.0
    %496 = vmatprep.subr.mxu0 0.0
    %497 = vmatpush1.msra.mxu0 0.0
    %498 = vmatprep.subr.mxu0 0.0
    %499 = vmatpush1.msra.mxu0 0.0
    %500 = vmatprep.subr.mxu0 0.0
    %501 = vmatpush1.msra.mxu0 0.0
    %502 = vmatprep.subr.mxu0 0.0
    %503 = vmatpush1.msra.mxu0 0.0
    %504 = vmatprep.subr.mxu0 0.0
    %505 = vmatpush1.msra.mxu0 0.0
    %506 = vmatprep.subr.mxu0 0.0
    %507 = vmatpush1.msra.mxu0 0.0
    %508 = vmatprep.subr.mxu0 0.0
    %509 = vmatpush1.msra.mxu0 0.0
    %510 = vmatprep.subr.mxu0 0.0
    %511 = vmatpush1.msra.mxu0 0.0
    %512 = vmatprep.subr.mxu0 0.0
    %513 = vmatpush1.msra.mxu0 0.0
    %514 = vmatprep.subr.mxu0 0.0
    %515 = vmatpush1.msra.mxu0 0.0
    %516 = vmatprep.subr.mxu0 0.0
    %517 = vmatpush1.msra.mxu0 0.0
    %518 = vmatprep.subr.mxu0 0.0
    %519 = vmatpush1.msra.mxu0 0.0
    %520 = vmatprep.subr.mxu0 0.0
    %521 = vmatpush1.msra.mxu0 0.0
    %522 = vmatprep.subr.mxu0 0.0
    %523 = vmatpush1.msra.mxu0 0.0
    %524 = vmatprep.subr.mxu0 0.0
    %525 = vmatpush1.msra.mxu0 0.0
    %526 = vmatprep.subr.mxu0 0.0
    %527 = vmatpush1.msra.mxu0 0.0
    %528 = vmatprep.subr.mxu0 0.0
    %529 = vmatpush1.msra.mxu0 0.0
    %530 = vmatprep.subr.mxu0 0.0
    %531 = vmatpush1.msra.mxu0 0.0
    %532 = vmatprep.subr.mxu0 0.0
    %533 = vmatpush1.msra.mxu0 0.0
    %534 = vmatprep.subr.mxu0 0.0
    %535 = vmatpush1.msra.mxu0 0.0
    %536 = vmatprep.subr.mxu0 0.0
    %537 = vmatpush1.msra.mxu0 0.0
    %538 = vmatprep.subr.mxu0 0.0
    %539 = vmatpush1.msra.mxu0 0.0
    %540 = vmatprep.mubr.f32.mxu0 0.0
    %541 = vmatmul.mubr.f32.gmra.mrb[0].mxu0 %v474
    %v542 = vpop.f32.mrb[0].mxu0
    %v543 = vadd.f32 %v470, %v542
    %v544 = vpop.f32.mrb[0].mxu0
    %545 = vdwg.mxu0
    %v546 = vmax.f32 %v543, 0.0
    %v547 = vld [vmem:[%s9] sm:$0xff]
    %v548 = vld [vmem:[%s9 + $0x8] sm:$0xff]
    %v549 = vld [vmem:[%s9 + $0x10] sm:$0xff]
    %v550 = vld [vmem:[%s9 + $0x18] sm:$0xff]
    %v551 = vld [vmem:[%s9 + $0x20] sm:$0xff]
    %v552 = vld [vmem:[%s9 + $0x28] sm:$0xff]
    %v553 = vld [vmem:[%s9 + $0x30] sm:$0xff]
    %v554 = vld [vmem:[%s9 + $0x38] sm:$0xff]
    %v555 = vld [vmem:[#allocation2] sm:$0x1]
    %v557 = vlaneseq
    %v558 = vshrl.u32 %v557, 7
    %v559 = vsub.s32 0, %v558
    %v560 = vrot.slane %v555, %v559
    %vm562 = vcmask 523264
    %v564 = vsel %vm562, %v546, 0
    %566 = vmatprep.subr.mxu0 0.0
    %567 = vmatpush1.msra.mxu0 %v547
    %568 = vmatprep.subr.mxu0 0.0
    %569 = vmatpush1.msra.mxu0 %v548
    %570 = vmatprep.subr.mxu0 0.0
    %571 = vmatpush1.msra.mxu0 %v549
    %572 = vmatprep.subr.mxu0 0.0
    %573 = vmatpush1.msra.mxu0 %v550
    %574 = vmatprep.subr.mxu0 0.0
    %575 = vmatpush1.msra.mxu0 %v551
    %576 = vmatprep.subr.mxu0 0.0
    %577 = vmatpush1.msra.mxu0 %v552
    %578 = vmatprep.subr.mxu0 0.0
    %579 = vmatpush1.msra.mxu0 %v553
    %580 = vmatprep.subr.mxu0 0.0
    %581 = vmatpush1.msra.mxu0 %v554
    %582 = vmatprep.subr.mxu0 0.0
    %583 = vmatpush1.msra.mxu0 0.0
    %584 = vmatprep.subr.mxu0 0.0
    %585 = vmatpush1.msra.mxu0 0.0
    %586 = vmatprep.subr.mxu0 0.0
    %587 = vmatpush1.msra.mxu0 0.0
    %588 = vmatprep.subr.mxu0 0.0
    %589 = vmatpush1.msra.mxu0 0.0
    %590 = vmatprep.subr.mxu0 0.0
    %591 = vmatpush1.msra.mxu0 0.0
    %592 = vmatprep.subr.mxu0 0.0
    %593 = vmatpush1.msra.mxu0 0.0
    %594 = vmatprep.subr.mxu0 0.0
    %595 = vmatpush1.msra.mxu0 0.0
    %596 = vmatprep.subr.mxu0 0.0
    %597 = vmatpush1.msra.mxu0 0.0
    %598 = vmatprep.subr.mxu0 0.0
    %599 = vmatpush1.msra.mxu0 0.0
    %600 = vmatprep.subr.mxu0 0.0
    %601 = vmatpush1.msra.mxu0 0.0
    %602 = vmatprep.subr.mxu0 0.0
    %603 = vmatpush1.msra.mxu0 0.0
    %604 = vmatprep.subr.mxu0 0.0
    %605 = vmatpush1.msra.mxu0 0.0
    %606 = vmatprep.subr.mxu0 0.0
    %607 = vmatpush1.msra.mxu0 0.0
    %608 = vmatprep.subr.mxu0 0.0
    %609 = vmatpush1.msra.mxu0 0.0
    %610 = vmatprep.subr.mxu0 0.0
    %611 = vmatpush1.msra.mxu0 0.0
    %612 = vmatprep.subr.mxu0 0.0
    %613 = vmatpush1.msra.mxu0 0.0
    %614 = vmatprep.subr.mxu0 0.0
    %615 = vmatpush1.msra.mxu0 0.0
    %616 = vmatprep.subr.mxu0 0.0
    %617 = vmatpush1.msra.mxu0 0.0
    %618 = vmatprep.subr.mxu0 0.0
    %619 = vmatpush1.msra.mxu0 0.0
    %620 = vmatprep.subr.mxu0 0.0
    %621 = vmatpush1.msra.mxu0 0.0
    %622 = vmatprep.subr.mxu0 0.0
    %623 = vmatpush1.msra.mxu0 0.0
    %624 = vmatprep.subr.mxu0 0.0
    %625 = vmatpush1.msra.mxu0 0.0
    %626 = vmatprep.subr.mxu0 0.0
    %627 = vmatpush1.msra.mxu0 0.0
    %628 = vmatprep.subr.mxu0 0.0
    %629 = vmatpush1.msra.mxu0 0.0
    %630 = vmatprep.mubr.f32.mxu0 0.0
    %631 = vmatmul.mubr.f32.gmra.mrb[0].mxu0 %v564
    %v632 = vpop.f32.mrb[0].mxu0
    %v633 = vadd.f32 %v560, %v632
    %v634 = vpop.f32.mrb[0].mxu0
    %635 = vdwg.mxu0
    %v636 = vxor.u32 %v633, 2147483648
    %v637 = vmul.f32 %v636, 1.442695
    %v638 = vpow.pop %v637
    %v639 = vadd.f32 %v638, 1.0
    %v640 = vrcp.pop %v639
    %v641 = vmul.f32 1.0, %v640
    %v642 = vld [vmem:[%s11] sm:$0xff]
    %v643 = vld [vmem:[%s11 + $0x8] sm:$0xff]
    %v644 = vld [vmem:[%s11 + $0x10] sm:$0xff]
    %v645 = vld [vmem:[%s11 + $0x18] sm:$0xff]
    %v646 = vld [vmem:[%s11 + $0x20] sm:$0xff]
    %v647 = vld [vmem:[%s11 + $0x28] sm:$0xff]
    %v648 = vld [vmem:[%s11 + $0x30] sm:$0xff]
    %v649 = vld [vmem:[%s11 + $0x38] sm:$0xff]
    %v650 = vld [vmem:[%s12] sm:$0x1]
    %v652 = vlaneseq
    %v653 = vshrl.u32 %v652, 7
    %v654 = vsub.s32 0, %v653
    %v655 = vrot.slane %v650, %v654
    %657 = vrot.lane.b32.xlu0 %v546, 64
    %v658 = vpop.permute.xlu0 %657
    %v659 = vsel %vm562, %v658, 0
    %661 = vmatprep.subr.mxu0 0.0
    %662 = vmatpush1.msra.mxu0 %v642
    %663 = vmatprep.subr.mxu0 0.0
    %664 = vmatpush1.msra.mxu0 %v643
    %665 = vmatprep.subr.mxu0 0.0
    %666 = vmatpush1.msra.mxu0 %v644
    %667 = vmatprep.subr.mxu0 0.0
    %668 = vmatpush1.msra.mxu0 %v645
    %669 = vmatprep.subr.mxu0 0.0
    %670 = vmatpush1.msra.mxu0 %v646
    %671 = vmatprep.subr.mxu0 0.0
    %672 = vmatpush1.msra.mxu0 %v647
    %673 = vmatprep.subr.mxu0 0.0
    %674 = vmatpush1.msra.mxu0 %v648
    %675 = vmatprep.subr.mxu0 0.0
    %676 = vmatpush1.msra.mxu0 %v649
    %677 = vmatprep.subr.mxu0 0.0
    %678 = vmatpush1.msra.mxu0 0.0
    %679 = vmatprep.subr.mxu0 0.0
    %680 = vmatpush1.msra.mxu0 0.0
    %681 = vmatprep.subr.mxu0 0.0
    %682 = vmatpush1.msra.mxu0 0.0
    %683 = vmatprep.subr.mxu0 0.0
    %684 = vmatpush1.msra.mxu0 0.0
    %685 = vmatprep.subr.mxu0 0.0
    %686 = vmatpush1.msra.mxu0 0.0
    %687 = vmatprep.subr.mxu0 0.0
    %688 = vmatpush1.msra.mxu0 0.0
    %689 = vmatprep.subr.mxu0 0.0
    %690 = vmatpush1.msra.mxu0 0.0
    %691 = vmatprep.subr.mxu0 0.0
    %692 = vmatpush1.msra.mxu0 0.0
    %693 = vmatprep.subr.mxu0 0.0
    %694 = vmatpush1.msra.mxu0 0.0
    %695 = vmatprep.subr.mxu0 0.0
    %696 = vmatpush1.msra.mxu0 0.0
    %697 = vmatprep.subr.mxu0 0.0
    %698 = vmatpush1.msra.mxu0 0.0
    %699 = vmatprep.subr.mxu0 0.0
    %700 = vmatpush1.msra.mxu0 0.0
    %701 = vmatprep.subr.mxu0 0.0
    %702 = vmatpush1.msra.mxu0 0.0
    %703 = vmatprep.subr.mxu0 0.0
    %704 = vmatpush1.msra.mxu0 0.0
    %705 = vmatprep.subr.mxu0 0.0
    %706 = vmatpush1.msra.mxu0 0.0
    %707 = vmatprep.subr.mxu0 0.0
    %708 = vmatpush1.msra.mxu0 0.0
    %709 = vmatprep.subr.mxu0 0.0
    %710 = vmatpush1.msra.mxu0 0.0
    %711 = vmatprep.subr.mxu0 0.0
    %712 = vmatpush1.msra.mxu0 0.0
    %713 = vmatprep.subr.mxu0 0.0
    %714 = vmatpush1.msra.mxu0 0.0
    %715 = vmatprep.subr.mxu0 0.0
    %716 = vmatpush1.msra.mxu0 0.0
    %717 = vmatprep.subr.mxu0 0.0
    %718 = vmatpush1.msra.mxu0 0.0
    %719 = vmatprep.subr.mxu0 0.0
    %720 = vmatpush1.msra.mxu0 0.0
    %721 = vmatprep.subr.mxu0 0.0
    %722 = vmatpush1.msra.mxu0 0.0
    %723 = vmatprep.subr.mxu0 0.0
    %724 = vmatpush1.msra.mxu0 0.0
    %725 = vmatprep.mubr.f32.mxu0 0.0
    %726 = vmatmul.mubr.f32.gmra.mrb[0].mxu0 %v659
    %v727 = vpop.f32.mrb[0].mxu0
    %v728 = vadd.f32 %v655, %v727
    %v729 = vpop.f32.mrb[0].mxu0
    %730 = vdwg.mxu0
    %v731 = vld [vmem:[%s13] sm:$0xff]
    %v732 = vld [vmem:[%s13 + $0x8] sm:$0xff]
    %v733 = vld [vmem:[%s13 + $0x10] sm:$0xff]
    %v734 = vld [vmem:[%s13 + $0x18] sm:$0xff]
    %v735 = vld [vmem:[#allocation3] sm:$0x1]
    %v737 = vlaneseq
    %v738 = vshrl.u32 %v737, 7
    %v739 = vsub.s32 0, %v738
    %v740 = vrot.slane %v735, %v739
    %742 = vrot.lane.b32.xlu0 %v458, 80
    %v743 = vpop.permute.xlu0 %742
    %v744 = vsel %vm290, %v743, 0
    %746 = vmatprep.subr.mxu0 0.0
    %747 = vmatpush1.msra.mxu0 %v731
    %748 = vmatprep.subr.mxu0 0.0
    %749 = vmatpush1.msra.mxu0 %v732
    %750 = vmatprep.subr.mxu0 0.0
    %751 = vmatpush1.msra.mxu0 %v733
    %752 = vmatprep.subr.mxu0 0.0
    %753 = vmatpush1.msra.mxu0 %v734
    %754 = vmatprep.subr.mxu0 0.0
    %755 = vmatpush1.msra.mxu0 0.0
    %756 = vmatprep.subr.mxu0 0.0
    %757 = vmatpush1.msra.mxu0 0.0
    %758 = vmatprep.subr.mxu0 0.0
    %759 = vmatpush1.msra.mxu0 0.0
    %760 = vmatprep.subr.mxu0 0.0
    %761 = vmatpush1.msra.mxu0 0.0
    %762 = vmatprep.subr.mxu0 0.0
    %763 = vmatpush1.msra.mxu0 0.0
    %764 = vmatprep.subr.mxu0 0.0
    %765 = vmatpush1.msra.mxu0 0.0
    %766 = vmatprep.subr.mxu0 0.0
    %767 = vmatpush1.msra.mxu0 0.0
    %768 = vmatprep.subr.mxu0 0.0
    %769 = vmatpush1.msra.mxu0 0.0
    %770 = vmatprep.subr.mxu0 0.0
    %771 = vmatpush1.msra.mxu0 0.0
    %772 = vmatprep.subr.mxu0 0.0
    %773 = vmatpush1.msra.mxu0 0.0
    %774 = vmatprep.subr.mxu0 0.0
    %775 = vmatpush1.msra.mxu0 0.0
    %776 = vmatprep.subr.mxu0 0.0
    %777 = vmatpush1.msra.mxu0 0.0
    %778 = vmatprep.subr.mxu0 0.0
    %779 = vmatpush1.msra.mxu0 0.0
    %780 = vmatprep.subr.mxu0 0.0
    %781 = vmatpush1.msra.mxu0 0.0
    %782 = vmatprep.subr.mxu0 0.0
    %783 = vmatpush1.msra.mxu0 0.0
    %784 = vmatprep.subr.mxu0 0.0
    %785 = vmatpush1.msra.mxu0 0.0
    %786 = vmatprep.subr.mxu0 0.0
    %787 = vmatpush1.msra.mxu0 0.0
    %788 = vmatprep.subr.mxu0 0.0
    %789 = vmatpush1.msra.mxu0 0.0
    %790 = vmatprep.subr.mxu0 0.0
    %791 = vmatpush1.msra.mxu0 0.0
    %792 = vmatprep.subr.mxu0 0.0
    %793 = vmatpush1.msra.mxu0 0.0
    %794 = vmatprep.subr.mxu0 0.0
    %795 = vmatpush1.msra.mxu0 0.0
    %796 = vmatprep.subr.mxu0 0.0
    %797 = vmatpush1.msra.mxu0 0.0
    %798 = vmatprep.subr.mxu0 0.0
    %799 = vmatpush1.msra.mxu0 0.0
    %800 = vmatprep.subr.mxu0 0.0
    %801 = vmatpush1.msra.mxu0 0.0
    %802 = vmatprep.subr.mxu0 0.0
    %803 = vmatpush1.msra.mxu0 0.0
    %804 = vmatprep.subr.mxu0 0.0
    %805 = vmatpush1.msra.mxu0 0.0
    %806 = vmatprep.subr.mxu0 0.0
    %807 = vmatpush1.msra.mxu0 0.0
    %808 = vmatprep.subr.mxu0 0.0
    %809 = vmatpush1.msra.mxu0 0.0
    %810 = vmatprep.mubr.f32.mxu0 0.0
    %811 = vmatmul.mubr.f32.gmra.mrb[0].mxu0 %v744
    %v812 = vpop.f32.mrb[0].mxu0
    %v813 = vadd.f32 %v740, %v812
    %v814 = vpop.f32.mrb[0].mxu0
    %815 = vdwg.mxu0
    %v816 = vxor.u32 %v813, 2147483648
    %v817 = vmul.f32 %v816, 1.442695
    %v818 = vpow.pop %v817
    %v819 = vadd.f32 %v818, 1.0
    %v820 = vrcp.pop %v819
    %v821 = vmul.f32 1.0, %v820
    %v822 = vmax.f32 %v456, 0.0
    %v823 = vld [vmem:[%s15] sm:$0xff]
    %v824 = vld [vmem:[%s15 + $0x8] sm:$0xff]
    %v825 = vld [vmem:[%s15 + $0x10] sm:$0xff]
    %v826 = vld [vmem:[%s15 + $0x18] sm:$0xff]
    %v827 = vld [vmem:[%s15 + $0x20] sm:$0xff]
    %v828 = vld [vmem:[%s15 + $0x28] sm:$0xff]
    %v829 = vld [vmem:[%s15 + $0x30] sm:$0xff]
    %v830 = vld [vmem:[%s15 + $0x38] sm:$0xff]
    %v831 = vld [vmem:[%s15 + $0x40] sm:$0xff]
    %v832 = vld [vmem:[%s15 + $0x48] sm:$0xff]
    %v833 = vld [vmem:[%s15 + $0x50] sm:$0xff]
    %v834 = vld [vmem:[%s15 + $0x58] sm:$0xff]
    %v835 = vld [vmem:[%s15 + $0x60] sm:$0xff]
    %v836 = vld [vmem:[%s15 + $0x68] sm:$0xff]
    %v837 = vld [vmem:[%s15 + $0x70] sm:$0xff]
    %v838 = vld [vmem:[%s15 + $0x78] sm:$0xff]
    %v839 = vld [vmem:[#allocation4] sm:$0x1]
    %v841 = vlaneseq
    %v842 = vshrl.u32 %v841, 7
    %v843 = vsub.s32 0, %v842
    %v844 = vrot.slane %v839, %v843
    %847 = vrot.lane.b32.xlu0 %v458, 48
    %v848 = vpop.permute.xlu0 %847
    %849 = vrot.lane.b32.xlu0 %v822, 48
    %v850 = vpop.permute.xlu0 %849
    %v851 = vsel %vm472, %v848, %v850
    %853 = vmatprep.subr.mxu0 0.0
    %854 = vmatpush1.msra.mxu0 %v823
    %855 = vmatprep.subr.mxu0 0.0
    %856 = vmatpush1.msra.mxu0 %v824
    %857 = vmatprep.subr.mxu0 0.0
    %858 = vmatpush1.msra.mxu0 %v825
    %859 = vmatprep.subr.mxu0 0.0
    %860 = vmatpush1.msra.mxu0 %v826
    %861 = vmatprep.subr.mxu0 0.0
    %862 = vmatpush1.msra.mxu0 %v827
    %863 = vmatprep.subr.mxu0 0.0
    %864 = vmatpush1.msra.mxu0 %v828
    %865 = vmatprep.subr.mxu0 0.0
    %866 = vmatpush1.msra.mxu0 %v829
    %867 = vmatprep.subr.mxu0 0.0
    %868 = vmatpush1.msra.mxu0 %v830
    %869 = vmatprep.subr.mxu0 0.0
    %870 = vmatpush1.msra.mxu0 %v831
    %871 = vmatprep.subr.mxu0 0.0
    %872 = vmatpush1.msra.mxu0 %v832
    %873 = vmatprep.subr.mxu0 0.0
    %874 = vmatpush1.msra.mxu0 %v833
    %875 = vmatprep.subr.mxu0 0.0
    %876 = vmatpush1.msra.mxu0 %v834
    %877 = vmatprep.subr.mxu0 0.0
    %878 = vmatpush1.msra.mxu0 %v835
    %879 = vmatprep.subr.mxu0 0.0
    %880 = vmatpush1.msra.mxu0 %v836
    %881 = vmatprep.subr.mxu0 0.0
    %882 = vmatpush1.msra.mxu0 %v837
    %883 = vmatprep.subr.mxu0 0.0
    %884 = vmatpush1.msra.mxu0 %v838
    %885 = vmatprep.subr.mxu0 0.0
    %886 = vmatpush1.msra.mxu0 0.0
    %887 = vmatprep.subr.mxu0 0.0
    %888 = vmatpush1.msra.mxu0 0.0
    %889 = vmatprep.subr.mxu0 0.0
    %890 = vmatpush1.msra.mxu0 0.0
    %891 = vmatprep.subr.mxu0 0.0
    %892 = vmatpush1.msra.mxu0 0.0
    %893 = vmatprep.subr.mxu0 0.0
    %894 = vmatpush1.msra.mxu0 0.0
    %895 = vmatprep.subr.mxu0 0.0
    %896 = vmatpush1.msra.mxu0 0.0
    %897 = vmatprep.subr.mxu0 0.0
    %898 = vmatpush1.msra.mxu0 0.0
    %899 = vmatprep.subr.mxu0 0.0
    %900 = vmatpush1.msra.mxu0 0.0
    %901 = vmatprep.subr.mxu0 0.0
    %902 = vmatpush1.msra.mxu0 0.0
    %903 = vmatprep.subr.mxu0 0.0
    %904 = vmatpush1.msra.mxu0 0.0
    %905 = vmatprep.subr.mxu0 0.0
    %906 = vmatpush1.msra.mxu0 0.0
    %907 = vmatprep.subr.mxu0 0.0
    %908 = vmatpush1.msra.mxu0 0.0
    %909 = vmatprep.subr.mxu0 0.0
    %910 = vmatpush1.msra.mxu0 0.0
    %911 = vmatprep.subr.mxu0 0.0
    %912 = vmatpush1.msra.mxu0 0.0
    %913 = vmatprep.subr.mxu0 0.0
    %914 = vmatpush1.msra.mxu0 0.0
    %915 = vmatprep.subr.mxu0 0.0
    %916 = vmatpush1.msra.mxu0 0.0
    %917 = vmatprep.mubr.f32.mxu0 0.0
    %918 = vmatmul.mubr.f32.gmra.mrb[0].mxu0 %v851
    %v919 = vpop.f32.mrb[0].mxu0
    %v920 = vadd.f32 %v844, %v919
    %v921 = vpop.f32.mrb[0].mxu0
    %922 = vdwg.mxu0
    %v923 = vxor.u32 %v920, 2147483648
    %v924 = vmul.f32 %v923, 1.442695
    %v925 = vpow.pop %v924
    %v926 = vadd.f32 %v925, 1.0
    %v927 = vrcp.pop %v926
    %v928 = vmul.f32 1.0, %v927
    %vm929 = vcmask 253952
    %v930 = vsel %vm929, %v361, 0.0
    %931 = vadd.xlane.f32.xlu0 %v930
    %v932 = vpop.xlane.xlu0 %931
    %v933 = vrot.slane %v932, 4
    %v934 = vadd.f32 %v932, %v933
    %v935 = vrot.slane %v934, 2
    %v936 = vadd.f32 %v934, %v935
    %v937 = vrot.slane %v936, 1
    %v938 = vadd.f32 %v936, %v937
    %s939 = vtos %v938
    %v940 = vrcp.pop 32.0
    %s941 = vtos %v940
    %s942 = smul.f32 %s939, %s941
    %s943 = sxor.u32 %s942, 2147483648
    %v944 = vstv %s943
    %v945 = vmul.f32 %v944, 1.442695
    %v946 = vpow.pop %v945
    %s947 = vtos %v946
    %s948 = sadd.f32 %s947, 1.0
    %v949 = vstv %s948
    %v950 = vrcp.pop %v949
    %s951 = vtos %v950
    %v952 = vstv %s951
    %v953 = vtanh.pop %v728
    %v954 = vxor.u32 %v728, 2147483648
    %v955 = vmul.f32 %v954, 1.442695
    %v956 = vpow.pop %v955
    %v957 = vadd.f32 %v956, 1.0
    %v958 = vrcp.pop %v957
    %v959 = vmul.f32 1.0, %v958
    %961 = vrot.lane.b32.xlu0 %v728, 32
    %v962 = vpop.permute.xlu0 %961
    %965 = vrot.lane.b32.xlu0 %v641, 64
    %v966 = vpop.permute.xlu0 %965
    %969 = vrot.lane.b32.xlu0 %v821, 65
    %v970 = vpop.permute.xlu0 %969
    %973 = vrot.lane.b32.xlu0 %v928, 66
    %v974 = vpop.permute.xlu0 %973
    %977 = vrot.lane.b32.xlu0 %v953, 68
    %v978 = vpop.permute.xlu0 %977
    %981 = vrot.lane.b32.xlu0 %v959, 68
    %v982 = vpop.permute.xlu0 %981
    %v984 = vsel %vm290, %v361, %v962
    %v985 = vsel %vm562, %v984, %v966
    %vm986 = vcmask 531456
    %v987 = vsel %vm986, %v985, %v970
    %vm988 = vcmask 539648
    %v989 = vsel %vm988, %v987, %v974
    %vm990 = vcmask 547840
    %v991 = vsel %vm990, %v989, %v952
    %vm992 = vcmask 556032
    %v993 = vsel %vm992, %v991, %v978
    %vm994 = vcmask 564224
    %v995 = vsel %vm994, %v993, %v982
    %vm996 = vcmask 572416
    %v997 = vsel %vm996, %v995, %v982
    %vm998 = vcmask 580608
    %v999 = vsel %vm998, %v997, 0.0
    %1000 = vst [vmem:[#allocation5] sm:$0xff] %v999
    // Predicated region
    $region70: #{tpu_custom_call.1} parent=1 // pred_check
      _
    $region71: #{tpu_custom_call.1} parent=1 // pred_check_branch
      %1002 = sbr.rel (0) target = $region73
    $region72: #{tpu_custom_call.1} parent=1 // pred_region
      %s1004 = ssub.s32 128, 128
      %1005 = vsyncadd [#allocation6], %s1004
      %s1007 = sshll.u32 [#allocation5], 4
      %s1008 = int_to_ptr.vmem [resolvable:$true] %s1007
      %1010 = dma.vmem_to_hbm [thread:$0]  %s1008, 128, %s17, [#allocation6]
    $region73: #{tpu_custom_call.1} parent=1 // pred_fallthru
      _
    // Predicated region
    $region74: #{tpu_custom_call.1} parent=1 // pred_check
      _
    $region75: #{tpu_custom_call.1} parent=1 // pred_check_branch
      %1012 = sbr.rel (0) target = $region77
    $region76: #{tpu_custom_call.1} parent=1 // pred_region
      %1013 = dma.done [#allocation6], 128
    $region77: #{tpu_custom_call.1} parent=1 // pred_fallthru
      _
    %1014 = vsyncpa [#allocation6], 1

</llo_original>
